<compile_context>
chip_gen: v5e
topology: v5e:2x2
jax: 0.10.0
libtpu: 0.0.40
codegen_flags: <defaults>
</compile_context>

<pallas_src>
import functools

import jax
import jax.numpy as jnp
from jax.experimental import pallas as pl
from jax.experimental.pallas import tpu as pltpu


# ----------------------------- kernel body ---------------------------------


def attention_kernel(hid_ref, enc_ref, wh_ref, we_ref, b_ref, v_ref, out_ref,
                     *, mxu_dtype):
    # hid_ref : (TB, D)      decoder hidden states for this batch tile
    # enc_ref : (S, TB, E2)  encoder outputs, original (src_len, batch, enc2) layout
    # wh_ref  : (D, D)   we_ref : (E2, D)   b_ref : (1, D)   v_ref : (1, D)   (f32)
    # out_ref : (TB, Sp)     attention weights; Sp >= S is the lane-dense store width
    S, TB, E2 = enc_ref.shape
    D = wh_ref.shape[1]
    Sp = out_ref.shape[-1]

    # MXU operands. When the large inputs already arrive in bf16 (cast at the
    # producer) the big astype below is a no-op and only the tiny weights cast.
    h = hid_ref[...].astype(mxu_dtype)                         # (TB, D)
    eflat = enc_ref[...].reshape(S * TB, E2).astype(mxu_dtype)  # (S*TB, E2)
    wh = wh_ref[...].astype(mxu_dtype)                          # (D, D)
    we = we_ref[...].astype(mxu_dtype)                          # (E2, D)

    # Hidden projection: ONE (TB, D) @ (D, D) matmul per tile, bias folded in.
    hproj = jnp.dot(h, wh, preferred_element_type=jnp.float32) + b_ref[...]   # (TB, D) f32

    # Encoder projection: the dominant matmul, (S*TB, E2) @ (E2, D) on the MXU,
    # f32 accumulation regardless of operand dtype.
    eproj = jnp.dot(eflat, we, preferred_element_type=jnp.float32)            # (S*TB, D) f32

    energy = jnp.tanh(eproj.reshape(S, TB, D) + hproj[None, :, :])            # (S, TB, D) f32

    # scores[tb, s] = sum_d energy[s, tb, d] * v[d]
    # VPU multiply + reduce over D, small XLU transpose -> lane-major (TB, S).
    scores = jnp.sum(energy * v_ref[...][None, :, :], axis=-1).T              # (TB, S) f32

    # Numerically-stable softmax over src_len; the divide goes to the EUP.
    m = jnp.max(scores, axis=-1, keepdims=True)                               # (TB, 1)
    p = jnp.exp(scores - m)                                                   # (TB, S)
    soft = p * pl.reciprocal(jnp.sum(p, axis=-1, keepdims=True), approx=True)

    if Sp != S:
        # Lane-dense (unmasked) store: pad the lane axis with zeros; the
        # wrapper slices [:, :S] back off.
        soft = jnp.concatenate(
            [soft, jnp.zeros((TB, Sp - S), dtype=soft.dtype)], axis=-1)
    out_ref[...] = soft


# --------------------------- tiling heuristics ------------------------------


def _round_up(x, m):
    return -(-x // m) * m


def _device_kind():
    try:
        return jax.devices()[0].device_kind.lower()
    except Exception:
        return ""


def _vmem_budget_and_limit():
    """Generation-aware VMEM working-set budget and scoped limit."""
    cap = 64 << 20  # conservative fallback = v7x physical VMEM
    try:
        info = pltpu.get_tpu_info()
        cap = int(getattr(info, "vmem_capacity_bytes", cap))
    except Exception:
        pass
    budget = cap // 2                              # ~32 MiB (v7x) / ~64 MiB (v5e/v6e)
    limit = min((cap * 3) // 4, cap - (4 << 20))   # explicit scoped-VMEM limit
    return budget, limit


def _vmem_working_set_bytes(tb, S, E2, D, Sp, enc_itemsize, hid_itemsize,
                            mxu_itemsize):
    """Honest per-tile VMEM footprint: lane padding + in-kernel temporaries."""
    lane, sub, f32 = 128, 8, 4
    tb8 = _round_up(tb, sub)
    d_l = _round_up(D, lane)
    e_l = _round_up(E2, lane)
    s_l = _round_up(Sp, lane)

    # Pipelined blocks: Pallas reserves two buffers each (including the
    # grid-invariant weights — pipeline_mode=pl.Buffered(1) would drop the
    # second weight copy; negligible at these D/E2 so left as a follow-up).
    enc_blk = S * tb8 * e_l * enc_itemsize
    hid_blk = tb8 * d_l * hid_itemsize
    out_blk = tb8 * s_l * f32
    wgt_blk = (_round_up(D, sub) + _round_up(E2, sub) + 2 * sub) * d_l * f32
    pipelined = 2 * (enc_blk + hid_blk + out_blk + wgt_blk)

    # In-kernel temporaries (roughly concurrent at the peak):
    #   cast/reshape copy of eflat, f32 eproj + energy + product, score tiles.
    eflat_copy = S * tb8 * e_l * mxu_itemsize
    temps = 3 * S * tb8 * d_l * f32 + 2 * tb8 * s_l * f32
    return pipelined + eflat_copy + temps


def _choose_batch_tile(batch, S, E2, D, Sp, enc_itemsize, hid_itemsize,
                       mxu_itemsize, vmem_budget_bytes, num_tc):
    """Pick the batch tile TB (and required batch padding).

    - TB is a sublane multiple (>= 8) so blocks tile the (8, 128) vreg cleanly.
    - The honest working set stays inside the generation-aware VMEM budget.
    - Single-TC parts take the largest tile (fewest serial grid steps);
      two-TC parts (v7x) prefer an even step count for a balanced core split.
    """
    cap = _round_up(batch, 8)   # no point tiling beyond the (padded) batch
    cands = [tb for tb in (1024, 512, 256, 128, 64, 32, 16, 8)
             if tb <= cap and _vmem_working_set_bytes(
                 tb, S, E2, D, Sp, enc_itemsize, hid_itemsize, mxu_itemsize)
             <= vmem_budget_bytes]
    if not cands:
        cands = [8]
    divides = [tb for tb in cands if batch % tb == 0]
    if divides:
        if num_tc > 1:
            even = [tb for tb in divides if (batch // tb) % num_tc == 0]
            if even:
                return even[0], 0          # largest tile with a balanced split
        return divides[0], 0               # largest tile, fewest grid steps
    tb = cands[-1]                          # awkward batch: minimize the pad
    return tb, (-batch) % tb


# ------------------------------- wrapper ------------------------------------


def attention_forward(hidden, encoder_outputs, w_attn, b_attn, v_w,
                      *, use_bf16_matmul=False):
    """
    hidden:           (batch, dec_hid_dim)             f32 or bf16
    encoder_outputs:  (src_len, batch, 2*enc_hid_dim)  f32 or bf16
    w_attn:           (dec_hid_dim, dec_hid_dim + 2*enc_hid_dim)  (PyTorch out, in)
    b_attn:           (dec_hid_dim,)
    v_w:              (1, dec_hid_dim)                 (PyTorch out, in)
    returns:          (batch, src_len) f32, softmax over src_len
    """
    S, B, E2 = encoder_outputs.shape
    D = hidden.shape[1]

    # Split attn Linear into hidden / encoder parts (hidden occupies the FIRST
    # dec_hid_dim input columns because forward() does cat((hidden, enc), -1)).
    wt = w_attn.T.astype(jnp.float32)                  # (D + E2, D)
    wh = wt[:D, :]                                     # (D, D)  acts on hidden
    we = wt[D:, :]                                     # (E2, D) acts on encoder outputs
    b = b_attn.reshape(1, D).astype(jnp.float32)       # (1, D)
    v_row = v_w.reshape(1, D).astype(jnp.float32)      # v as a broadcast row

    # MXU operand dtype. bf16 inputs produced UPSTREAM already halve the
    # dominant HBM stream; use_bf16_matmul only switches the MXU passes.
    inputs_bf16 = (encoder_outputs.dtype == jnp.bfloat16
                   or hidden.dtype == jnp.bfloat16)
    mxu_dtype = jnp.bfloat16 if (use_bf16_matmul or inputs_bf16) else jnp.float32
    # TODO(synk): on v7x encoder_outputs could be fp8 with the scale folded
    # into `we` (f32 accumulation makes it dequant-free).

    # Lane-dense output stores when src_len < 128 (slice back in the wrapper).
    Sp = S if S >= 128 else 128

    budget, vmem_limit = _vmem_budget_and_limit()
    is_v7 = "v7" in _device_kind()
    num_tc = 2 if is_v7 else 1          # v4/v5p megacore is handled by "parallel"

    TB, pad_b = _choose_batch_tile(
        B, S, E2, D, Sp,
        enc_itemsize=encoder_outputs.dtype.itemsize,
        hid_itemsize=hidden.dtype.itemsize,
        mxu_itemsize=jnp.dtype(mxu_dtype).itemsize,
        vmem_budget_bytes=budget, num_tc=num_tc)

    if pad_b:                                          # only for awkward small/odd B
        hidden = jnp.pad(hidden, ((0, pad_b), (0, 0)))
        encoder_outputs = jnp.pad(encoder_outputs, ((0, 0), (0, pad_b), (0, 0)))
    Bp = B + pad_b
    steps = Bp // TB

    # On v7x, split the batch axis across the two TensorCores explicitly.
    if is_v7 and steps >= 2 and steps % 2 == 0:
        dim_sem = (pltpu.CORE_PARALLEL,)
    else:
        dim_sem = ("parallel",)

    grid_spec = pltpu.PrefetchScalarGridSpec(
        num_scalar_prefetch=0,
        grid=(steps,),
        in_specs=[
            pl.BlockSpec((TB, D), lambda i: (i, 0)),          # hidden tile
            pl.BlockSpec((S, TB, E2), lambda i: (0, i, 0)),   # encoder outputs (no transpose)
            pl.BlockSpec((D, D), lambda i: (0, 0)),           # Wh
            pl.BlockSpec((E2, D), lambda i: (0, 0)),          # We
            pl.BlockSpec((1, D), lambda i: (0, 0)),           # bias
            pl.BlockSpec((1, D), lambda i: (0, 0)),           # v
        ],
        out_specs=pl.BlockSpec((TB, Sp), lambda i: (i, 0)),
    )
    # NOTE: if profiling shows exposed enc DMA, sweep pipeline_mode=
    # pl.Buffered(3) on the enc BlockSpec (trades directly against TB).

    flops = 2 * Bp * S * E2 * D + 2 * Bp * D * D + 2 * Bp * S * D
    bytes_accessed = (hidden.size * hidden.dtype.itemsize
                      + encoder_outputs.size * encoder_outputs.dtype.itemsize
                      + (wh.size + we.size + b.size + v_row.size) * 4
                      + Bp * Sp * 4)
    cost = pl.CostEstimate(flops=flops,
                           transcendentals=Bp * S * (D + 1),
                           bytes_accessed=bytes_accessed)

    out = pl.pallas_call(
        functools.partial(attention_kernel, mxu_dtype=mxu_dtype),
        out_shape=jax.ShapeDtypeStruct((Bp, Sp), jnp.float32),
        grid_spec=grid_spec,
        compiler_params=pltpu.CompilerParams(
            dimension_semantics=dim_sem,
            vmem_limit_bytes=int(vmem_limit)),
        cost_estimate=cost,
    )(hidden, encoder_outputs, wh, we, b, v_row)

    if pad_b:
        out = out[:B]
    if Sp != S:
        out = out[:, :S]
    return out


# ------------------------------ reference -----------------------------------


def attention_reference(hidden, encoder_outputs, w_attn, b_attn, v_w):
    # pure-JAX reference identical to the PyTorch forward
    S, B, E2 = encoder_outputs.shape
    D = hidden.shape[1]
    hid_rep = jnp.broadcast_to(hidden[:, None, :], (B, S, D))
    enc = jnp.transpose(encoder_outputs, (1, 0, 2))
    cat = jnp.concatenate([hid_rep, enc], axis=2)
    energy = jnp.tanh(
        jnp.einsum("bsi,oi->bso", cat, w_attn,
                   precision=jax.lax.Precision.HIGHEST) + b_attn)
    scores = jnp.einsum("bso,o->bs", energy, v_w[0],
                        precision=jax.lax.Precision.HIGHEST)
    return jax.nn.softmax(scores, axis=1)


if __name__ == "__main__":
    enc_hid_dim = 16
    dec_hid_dim = 32
    batch = 32
    src_len = 8
    enc2_dim = 2 * enc_hid_dim
    in_dim = enc2_dim + dec_hid_dim

    key = jax.random.PRNGKey(0)
    k_h, k_e, k_w, k_b, k_v = jax.random.split(key, 5)

    hidden = jax.random.normal(k_h, (batch, dec_hid_dim), dtype=jnp.float32)
    encoder_outputs = jax.random.normal(
        k_e, (src_len, batch, enc2_dim), dtype=jnp.float32)

    # deterministic parameter init (shapes match nn.Linear: (out, in))
    w_attn = jax.random.normal(k_w, (dec_hid_dim, in_dim),
                               dtype=jnp.float32) * 0.1
    b_attn = jax.random.normal(k_b, (dec_hid_dim,), dtype=jnp.float32) * 0.1
    v_w = jax.random.normal(k_v, (1, dec_hid_dim), dtype=jnp.float32) * 0.1

    ref = attention_reference(hidden, encoder_outputs, w_attn, b_attn, v_w)

    # f32 path (approx-reciprocal softmax -> slightly relaxed tolerance)
    out = attention_forward(hidden, encoder_outputs, w_attn, b_attn, v_w)
    out = jax.block_until_ready(out)
    assert out.shape == (batch, src_len)
    assert jnp.allclose(jnp.sum(out, axis=1), 1.0, atol=3e-3)
    assert jnp.allclose(out, ref, atol=3e-3), \
        float(jnp.max(jnp.abs(out - ref)))

    # bf16 MXU path (in-kernel cast; valid on v5e/v6e/v7x)
    out_bf = attention_forward(hidden, encoder_outputs, w_attn, b_attn, v_w,
                               use_bf16_matmul=True)
    out_bf = jax.block_until_ready(out_bf)
    assert jnp.allclose(out_bf, ref, atol=2e-2), \
        float(jnp.max(jnp.abs(out_bf - ref)))

    # bf16 inputs produced upstream — the bandwidth-saving path: the dominant
    # encoder DMA moves half the bytes, weights/bias and softmax stay f32.
    out_bf_in = attention_forward(hidden.astype(jnp.bfloat16),
                                  encoder_outputs.astype(jnp.bfloat16),
                                  w_attn, b_attn, v_w)
    out_bf_in = jax.block_until_ready(out_bf_in)
    assert out_bf_in.shape == (batch, src_len)
    assert jnp.allclose(out_bf_in, ref, atol=3e-2), \
        float(jnp.max(jnp.abs(out_bf_in - ref)))

    # batch not a multiple of 8 — exercises the pad/slice fallback path
    hidden_odd = hidden[:10]
    enc_odd = encoder_outputs[:, :10, :]
    out_odd = attention_forward(hidden_odd, enc_odd, w_attn, b_attn, v_w)
    out_odd = jax.block_until_ready(out_odd)
    ref_odd = attention_reference(hidden_odd, enc_odd, w_attn, b_attn, v_w)
    assert out_odd.shape == (10, src_len)
    assert jnp.allclose(out_odd, ref_odd, atol=3e-3)

    print("KERNEL_OK")
</pallas_src>

<mosaic_0001>
module attributes {stable_mosaic.version = 11 : i64} {
  func.func @attention_kernel(%arg0: i32, %arg1: memref<32x32xf32, #tpu.memory_space<vmem>>, %arg2: memref<8x32x32xf32, #tpu.memory_space<vmem>>, %arg3: memref<32x32xf32, #tpu.memory_space<vmem>>, %arg4: memref<32x32xf32, #tpu.memory_space<vmem>>, %arg5: memref<1x32xf32, #tpu.memory_space<vmem>>, %arg6: memref<1x32xf32, #tpu.memory_space<vmem>>, %arg7: memref<32x128xf32, #tpu.memory_space<vmem>>) attributes {dimension_semantics = [#tpu.dimension_semantics<parallel>], iteration_bounds = array<i64: 1>, scalar_prefetch = 0 : i64, scratch_operands = 0 : i64, tpu.core_type = #tpu.core_type<tc>, window_params = [{transform_indices = @transform_0, window_bounds = array<i64: 32, 32>}, {transform_indices = @transform_1, window_bounds = array<i64: 8, 32, 32>}, {pipeline_mode = #tpu.pipeline_mode<synchronous>, transform_indices = @transform_2, window_bounds = array<i64: 32, 32>}, {pipeline_mode = #tpu.pipeline_mode<synchronous>, transform_indices = @transform_3, window_bounds = array<i64: 32, 32>}, {pipeline_mode = #tpu.pipeline_mode<synchronous>, transform_indices = @transform_4, window_bounds = array<i64: 1, 32>}, {pipeline_mode = #tpu.pipeline_mode<synchronous>, transform_indices = @transform_5, window_bounds = array<i64: 1, 32>}, {transform_indices = @transform_6, window_bounds = array<i64: 32, 128>}]} {
    %c0 = arith.constant 0 : index
    %c0_0 = arith.constant 0 : index
    %0 = vector.load %arg1[%c0, %c0_0] : memref<32x32xf32, #tpu.memory_space<vmem>>, vector<32x32xf32>
    %c0_1 = arith.constant 0 : index
    %c0_2 = arith.constant 0 : index
    %c0_3 = arith.constant 0 : index
    %1 = vector.load %arg2[%c0_1, %c0_2, %c0_3] : memref<8x32x32xf32, #tpu.memory_space<vmem>>, vector<8x32x32xf32>
    %2 = vector.shape_cast %1 : vector<8x32x32xf32> to vector<256x32xf32>
    %c0_4 = arith.constant 0 : index
    %c0_5 = arith.constant 0 : index
    %3 = vector.load %arg3[%c0_4, %c0_5] : memref<32x32xf32, #tpu.memory_space<vmem>>, vector<32x32xf32>
    %c0_6 = arith.constant 0 : index
    %c0_7 = arith.constant 0 : index
    %4 = vector.load %arg4[%c0_6, %c0_7] : memref<32x32xf32, #tpu.memory_space<vmem>>, vector<32x32xf32>
    %cst = arith.constant dense<0.000000e+00> : vector<32x32xf32>
    %5 = tpu.matmul %0, %3, %cst {dimension_numbers = #tpu.dot_dimension_numbers<[1], [0], [0], [1], [0, 0, 1, 1], [], []>} : vector<32x32xf32>, vector<32x32xf32>, vector<32x32xf32> -> vector<32x32xf32>
    %c0_8 = arith.constant 0 : index
    %c0_9 = arith.constant 0 : index
    %6 = vector.load %arg5[%c0_8, %c0_9] : memref<1x32xf32, #tpu.memory_space<vmem>>, vector<1x32xf32>
    %7 = vector.broadcast %6 : vector<1x32xf32> to vector<32x32xf32>
    %8 = arith.addf %5, %7 : vector<32x32xf32>
    %cst_10 = arith.constant dense<0.000000e+00> : vector<256x32xf32>
    %9 = tpu.matmul %2, %4, %cst_10 {dimension_numbers = #tpu.dot_dimension_numbers<[1], [0], [0], [1], [0, 0, 1, 1], [], []>} : vector<256x32xf32>, vector<32x32xf32>, vector<256x32xf32> -> vector<256x32xf32>
    %10 = vector.shape_cast %9 : vector<256x32xf32> to vector<8x32x32xf32>
    %11 = vector.shape_cast %8 : vector<32x32xf32> to vector<1x32x32xf32>
    %12 = vector.broadcast %11 : vector<1x32x32xf32> to vector<8x32x32xf32>
    %13 = arith.addf %10, %12 : vector<8x32x32xf32>
    %14 = math.tanh %13 : vector<8x32x32xf32>
    %c0_11 = arith.constant 0 : index
    %c0_12 = arith.constant 0 : index
    %15 = vector.load %arg6[%c0_11, %c0_12] : memref<1x32xf32, #tpu.memory_space<vmem>>, vector<1x32xf32>
    %16 = vector.shape_cast %15 : vector<1x32xf32> to vector<1x1x32xf32>
    %17 = vector.broadcast %16 : vector<1x1x32xf32> to vector<8x32x32xf32>
    %18 = arith.mulf %14, %17 : vector<8x32x32xf32>
    %cst_13 = arith.constant dense<0.000000e+00> : vector<8x32xf32>
    %19 = vector.multi_reduction <add>, %18, %cst_13 [2] : vector<8x32x32xf32> to vector<8x32xf32>
    %20 = tpu.transpose %19, [1, 0] : vector<8x32xf32> -> vector<32x8xf32>
    %cst_14 = arith.constant dense<0xFF800000> : vector<32xf32>
    %21 = vector.multi_reduction <maximumf>, %20, %cst_14 [1] : vector<32x8xf32> to vector<32xf32>
    %22 = vector.shape_cast %21 : vector<32xf32> to vector<32x1xf32>
    %23 = vector.broadcast %22 : vector<32x1xf32> to vector<32x8xf32>
    %24 = arith.subf %20, %23 : vector<32x8xf32>
    %25 = math.exp %24 : vector<32x8xf32>
    %cst_15 = arith.constant dense<0.000000e+00> : vector<32xf32>
    %26 = vector.multi_reduction <add>, %25, %cst_15 [1] : vector<32x8xf32> to vector<32xf32>
    %27 = vector.shape_cast %26 : vector<32xf32> to vector<32x1xf32>
    %28 = tpu.reciprocal %27 {approx = true} : vector<32x1xf32> -> vector<32x1xf32>
    %29 = vector.broadcast %28 : vector<32x1xf32> to vector<32x8xf32>
    %30 = arith.mulf %25, %29 : vector<32x8xf32>
    %cst_16 = arith.constant 0.000000e+00 : f32
    %31 = vector.broadcast %cst_16 : f32 to vector<32x120xf32>
    %32 = tpu.concatenate %30, %31 in 1 : vector<32x8xf32>, vector<32x120xf32> -> vector<32x128xf32>
    %c0_17 = arith.constant 0 : index
    %c0_18 = arith.constant 0 : index
    %33 = vector.load %arg7[%c0_17, %c0_18] : memref<32x128xf32, #tpu.memory_space<vmem>>, vector<32x128xf32>
    tpu.vector_store %arg7[%c0_17, %c0_18], %32 {strides = array<i32>} : memref<32x128xf32, #tpu.memory_space<vmem>>, vector<32x128xf32>,
    return
  }
  func.func @transform_0(%arg0: i32) -> (i32, i32) {
    %c0_i32 = arith.constant 0 : i32
    %c0_i32_0 = arith.constant 0 : i32
    return %arg0, %c0_i32 : i32, i32
  }
  func.func @transform_1(%arg0: i32) -> (i32, i32, i32) {
    %c0_i32 = arith.constant 0 : i32
    %c0_i32_0 = arith.constant 0 : i32
    %c0_i32_1 = arith.constant 0 : i32
    return %c0_i32, %arg0, %c0_i32_0 : i32, i32, i32
  }
  func.func @transform_2(%arg0: i32) -> (i32, i32) {
    %c0_i32 = arith.constant 0 : i32
    %c0_i32_0 = arith.constant 0 : i32
    %c0_i32_1 = arith.constant 0 : i32
    return %c0_i32, %c0_i32_0 : i32, i32
  }
  func.func @transform_3(%arg0: i32) -> (i32, i32) {
    %c0_i32 = arith.constant 0 : i32
    %c0_i32_0 = arith.constant 0 : i32
    %c0_i32_1 = arith.constant 0 : i32
    return %c0_i32, %c0_i32_0 : i32, i32
  }
  func.func @transform_4(%arg0: i32) -> (i32, i32) {
    %c0_i32 = arith.constant 0 : i32
    %c0_i32_0 = arith.constant 0 : i32
    %c0_i32_1 = arith.constant 0 : i32
    return %c0_i32, %c0_i32_0 : i32, i32
  }
  func.func @transform_5(%arg0: i32) -> (i32, i32) {
    %c0_i32 = arith.constant 0 : i32
    %c0_i32_0 = arith.constant 0 : i32
    %c0_i32_1 = arith.constant 0 : i32
    return %c0_i32, %c0_i32_0 : i32, i32
  }
  func.func @transform_6(%arg0: i32) -> (i32, i32) {
    %c0_i32 = arith.constant 0 : i32
    %c0_i32_0 = arith.constant 0 : i32
    return %arg0, %c0_i32 : i32, i32
  }
}

</mosaic_0001>

<llo_original>
// kernel: tpu_custom_call.1
$region0: #{tpu_custom_call.1}
  #allocation0 [shape = 'u32[]', space=smem, size = 0x4, offset = 0x4, fixed_abs, tag = 'smem constant byte address 0x4 - core index']
  #allocation1 [shape = 'u32[72,128]{1,0:T(1,128)}', space=vmem, size = 0x9000, scoped, tag = 'internal scratch']
  %s0 = inlined_call_operand.hbm [shape: f32[32,32], index: 0, kind: input, shape index: {}]
  %s1 = inlined_call_operand.hbm [shape: f32[8,32,32], index: 1, kind: input, shape index: {}]
  %s2 = inlined_call_operand.hbm [shape: f32[32,32], index: 2, kind: input, shape index: {}]
  %s3 = inlined_call_operand.hbm [shape: f32[32,32], index: 3, kind: input, shape index: {}]
  %s4 = inlined_call_operand.vmem [shape: f32[1,32], index: 4, kind: input, shape index: {}]
  %s5 = inlined_call_operand.vmem [shape: f32[1,32], index: 5, kind: input, shape index: {}]
  %s6 = inlined_call_operand.hbm [shape: f32[32,128], index: 6, kind: output, shape index: {}]
  %s7 = sld [smem:[#allocation0]]
  $region50: #{tpu_custom_call.1} parent=0
    _
  %s9 = ssub.s32 1, %s7
  %s10 = scalar_select 0, %s9, %s7
  $region1: #{tpu_custom_call.1} parent=0
    #allocation2 [shape = 'u8[16384]{0}', space=vmem, size = 0x4000, scoped, tag = 'input window, operand 0, single buffered']
    #allocation3 [shape = 's32[1]{0}', space=sflag, size = 0x4, scoped, tag = 'scoped memory for tpu_custom_call.1']
    #allocation4 [shape = 's32[1]{0}', space=sflag, size = 0x4, scoped, tag = 'scoped memory for tpu_custom_call.1']
    #allocation5 [shape = 'u8[131072]{0}', space=vmem, size = 0x20000, scoped, tag = 'input window, operand 1, single buffered']
    #allocation6 [shape = 's32[1]{0}', space=sflag, size = 0x4, scoped, tag = 'scoped memory for tpu_custom_call.1']
    #allocation7 [shape = 'u8[16384]{0}', space=vmem, size = 0x4000, scoped, tag = 'input window, operand 2, single buffered']
    #allocation8 [shape = 'u8[16384]{0}', space=vmem, size = 0x4000, scoped, tag = 'input window, operand 3, single buffered']
    #allocation9 [shape = 's32[1]{0}', space=sflag, size = 0x4, scoped, tag = 'scoped memory for tpu_custom_call.1']
    #allocation10 [shape = 'u8[16384]{0}', space=vmem, size = 0x4000, scoped, tag = 'output window, operand 0, single buffered']
    %11 = vsyncpa [#allocation3], 0
    %12 = vsyncpa [#allocation6], 0
    %13 = vsyncpa [#allocation9], 0
    %14 = vsyncpa [#allocation4], 0
    // Predicated region
    $region2: #{tpu_custom_call.1} parent=1 // pred_check
      _
    $region3: #{tpu_custom_call.1} parent=1 // pred_check_branch
      %16 = sbr.rel (0) target = $region5
    $region4: #{tpu_custom_call.1} parent=1 // pred_region
      %18 = vsyncadd [#allocation3], 0
      %s19 = sshll.u32 %s0, 4
      %s20 = int_to_ptr.hbm [resolvable:$true] %s19
      %s21 = sshll.u32 [#allocation2], 4
      %s22 = int_to_ptr.vmem [resolvable:$true] %s21
      %27 = dma.hbm_to_vmem [thread:$0]  %s20, 512, %s22, [#allocation3], 128, 128, 8
    $region5: #{tpu_custom_call.1} parent=1 // pred_fallthru
      _
    // Predicated region
    $region6: #{tpu_custom_call.1} parent=1 // pred_check
      _
    $region7: #{tpu_custom_call.1} parent=1 // pred_check_branch
      %29 = sbr.rel (0) target = $region9
    $region8: #{tpu_custom_call.1} parent=1 // pred_region
      %31 = vsyncadd [#allocation6], 0
      %s32 = sshll.u32 %s1, 4
      %s33 = int_to_ptr.hbm [resolvable:$true] %s32
      %s34 = sshll.u32 [#allocation5], 4
      %s35 = int_to_ptr.vmem [resolvable:$true] %s34
      %40 = dma.hbm_to_vmem [thread:$0]  %s33, 4096, %s35, [#allocation6], 128, 128, 8
    $region9: #{tpu_custom_call.1} parent=1 // pred_fallthru
      _
    // Predicated region
    $region10: #{tpu_custom_call.1} parent=1 // pred_check
      _
    $region11: #{tpu_custom_call.1} parent=1 // pred_check_branch
      %42 = sbr.rel (0) target = $region13
    $region12: #{tpu_custom_call.1} parent=1 // pred_region
      %44 = vsyncadd [#allocation6], 0
      %s45 = sshll.u32 %s2, 4
      %s46 = int_to_ptr.hbm [resolvable:$true] %s45
      %s47 = sshll.u32 [#allocation7], 4
      %s48 = int_to_ptr.vmem [resolvable:$true] %s47
      %53 = dma.hbm_to_vmem [thread:$0]  %s46, 512, %s48, [#allocation6], 128, 128, 8
    $region13: #{tpu_custom_call.1} parent=1 // pred_fallthru
      _
    // Predicated region
    $region14: #{tpu_custom_call.1} parent=1 // pred_check
      _
    $region15: #{tpu_custom_call.1} parent=1 // pred_check_branch
      %55 = sbr.rel (0) target = $region17
    $region16: #{tpu_custom_call.1} parent=1 // pred_region
      %57 = vsyncadd [#allocation9], 0
      %s58 = sshll.u32 %s3, 4
      %s59 = int_to_ptr.hbm [resolvable:$true] %s58
      %s60 = sshll.u32 [#allocation8], 4
      %s61 = int_to_ptr.vmem [resolvable:$true] %s60
      %66 = dma.hbm_to_vmem [thread:$0]  %s59, 512, %s61, [#allocation9], 128, 128, 8
    $region17: #{tpu_custom_call.1} parent=1 // pred_fallthru
      _
    // Predicated region
    $region18: #{tpu_custom_call.1} parent=1 // pred_check
      _
    $region19: #{tpu_custom_call.1} parent=1 // pred_check_branch
      %68 = sbr.rel (0) target = $region21
    $region20: #{tpu_custom_call.1} parent=1 // pred_region
      _
    $region21: #{tpu_custom_call.1} parent=1 // pred_fallthru
      _
    // Predicated region
    $region22: #{tpu_custom_call.1} parent=1 // pred_check
      _
    $region23: #{tpu_custom_call.1} parent=1 // pred_check_branch
      %70 = sbr.rel (0) target = $region25
    $region24: #{tpu_custom_call.1} parent=1 // pred_region
      _
    $region25: #{tpu_custom_call.1} parent=1 // pred_fallthru
      _
    // Predicated region
    $region26: #{tpu_custom_call.1} parent=1 // pred_check
      _
    $region27: #{tpu_custom_call.1} parent=1 // pred_check_branch
      %72 = sbr.rel (0) target = $region29
    $region28: #{tpu_custom_call.1} parent=1 // pred_region
      %74 = dma.done [#allocation3], 512
    $region29: #{tpu_custom_call.1} parent=1 // pred_fallthru
      _
    // Predicated region
    $region30: #{tpu_custom_call.1} parent=1 // pred_check
      _
    $region31: #{tpu_custom_call.1} parent=1 // pred_check_branch
      %76 = sbr.rel (0) target = $region33
    $region32: #{tpu_custom_call.1} parent=1 // pred_region
      %78 = dma.done [#allocation6], 4096
    $region33: #{tpu_custom_call.1} parent=1 // pred_fallthru
      _
    // Predicated region
    $region34: #{tpu_custom_call.1} parent=1 // pred_check
      _
    $region35: #{tpu_custom_call.1} parent=1 // pred_check_branch
      %80 = sbr.rel (0) target = $region37
    $region36: #{tpu_custom_call.1} parent=1 // pred_region
      %82 = dma.done [#allocation6], 512
    $region37: #{tpu_custom_call.1} parent=1 // pred_fallthru
      _
    // Predicated region
    $region38: #{tpu_custom_call.1} parent=1 // pred_check
      _
    $region39: #{tpu_custom_call.1} parent=1 // pred_check_branch
      %84 = sbr.rel (0) target = $region41
    $region40: #{tpu_custom_call.1} parent=1 // pred_region
      %86 = dma.done [#allocation9], 512
    $region41: #{tpu_custom_call.1} parent=1 // pred_fallthru
      _
    %v87 = vld [vmem:[#allocation2] sm:$0xff]
    %v88 = vld [vmem:[#allocation2 + $0x8] sm:$0xff]
    %v89 = vld [vmem:[#allocation2 + $0x10] sm:$0xff]
    %v90 = vld [vmem:[#allocation2 + $0x18] sm:$0xff]
    %v91 = vld [vmem:[#allocation5] sm:$0xff]
    %v92 = vld [vmem:[#allocation5 + $0x8] sm:$0xff]
    %v93 = vld [vmem:[#allocation5 + $0x10] sm:$0xff]
    %v94 = vld [vmem:[#allocation5 + $0x18] sm:$0xff]
    %v95 = vld [vmem:[#allocation5 + $0x20] sm:$0xff]
    %v96 = vld [vmem:[#allocation5 + $0x28] sm:$0xff]
    %v97 = vld [vmem:[#allocation5 + $0x30] sm:$0xff]
    %v98 = vld [vmem:[#allocation5 + $0x38] sm:$0xff]
    %v99 = vld [vmem:[#allocation5 + $0x40] sm:$0xff]
    %v100 = vld [vmem:[#allocation5 + $0x48] sm:$0xff]
    %v101 = vld [vmem:[#allocation5 + $0x50] sm:$0xff]
    %v102 = vld [vmem:[#allocation5 + $0x58] sm:$0xff]
    %v103 = vld [vmem:[#allocation5 + $0x60] sm:$0xff]
    %v104 = vld [vmem:[#allocation5 + $0x68] sm:$0xff]
    %v105 = vld [vmem:[#allocation5 + $0x70] sm:$0xff]
    %v106 = vld [vmem:[#allocation5 + $0x78] sm:$0xff]
    %v107 = vld [vmem:[#allocation5 + $0x80] sm:$0xff]
    %v108 = vld [vmem:[#allocation5 + $0x88] sm:$0xff]
    %v109 = vld [vmem:[#allocation5 + $0x90] sm:$0xff]
    %v110 = vld [vmem:[#allocation5 + $0x98] sm:$0xff]
    %v111 = vld [vmem:[#allocation5 + $0xa0] sm:$0xff]
    %v112 = vld [vmem:[#allocation5 + $0xa8] sm:$0xff]
    %v113 = vld [vmem:[#allocation5 + $0xb0] sm:$0xff]
    %v114 = vld [vmem:[#allocation5 + $0xb8] sm:$0xff]
    %v115 = vld [vmem:[#allocation5 + $0xc0] sm:$0xff]
    %v116 = vld [vmem:[#allocation5 + $0xc8] sm:$0xff]
    %v117 = vld [vmem:[#allocation5 + $0xd0] sm:$0xff]
    %v118 = vld [vmem:[#allocation5 + $0xd8] sm:$0xff]
    %v119 = vld [vmem:[#allocation5 + $0xe0] sm:$0xff]
    %v120 = vld [vmem:[#allocation5 + $0xe8] sm:$0xff]
    %v121 = vld [vmem:[#allocation5 + $0xf0] sm:$0xff]
    %v122 = vld [vmem:[#allocation5 + $0xf8] sm:$0xff]
    %v123 = vld [vmem:[#allocation7] sm:$0xff]
    %v124 = vld [vmem:[#allocation7 + $0x8] sm:$0xff]
    %v125 = vld [vmem:[#allocation7 + $0x10] sm:$0xff]
    %v126 = vld [vmem:[#allocation7 + $0x18] sm:$0xff]
    %v127 = vld [vmem:[#allocation8] sm:$0xff]
    %v128 = vld [vmem:[#allocation8 + $0x8] sm:$0xff]
    %v129 = vld [vmem:[#allocation8 + $0x10] sm:$0xff]
    %v130 = vld [vmem:[#allocation8 + $0x18] sm:$0xff]
    %v131 = vld [vmem:[%s4] sm:$0x1]
    %v133 = vperm.slane %v131, 0
    %vm135 = vcmask 261120
    %v137 = vsel %vm135, %v87, 0
    %v140 = vsel %vm135, %v88, 0
    %v143 = vsel %vm135, %v89, 0
    %v146 = vsel %vm135, %v90, 0
    %148 = vmatpush.msra.mxu0 0.0
    %149 = vmatpush.msra.mxu0 0.0
    %150 = vmatpush.msra.mxu0 0.0
    %151 = vmatpush.msra.mxu0 0.0
    %152 = vmatpush.msra.mxu0 0.0
    %153 = vmatpush.msra.mxu0 0.0
    %154 = vmatpush.msra.mxu0 0.0
    %155 = vmatpush.msra.mxu0 0.0
    %156 = vmatpush.msra.mxu0 0.0
    %157 = vmatpush.msra.mxu0 0.0
    %158 = vmatpush.msra.mxu0 0.0
    %159 = vmatpush.msra.mxu0 0.0
    %160 = vmatpush.msra.mxu0 %v126
    %161 = vmatpush.msra.mxu0 %v125
    %162 = vmatpush.msra.mxu0 %v124
    %163 = vmatpush.msra.mxu0 %v123
    %164 = vmatmul.f32.gmra.mxu0 %v137
    %v165 = vpop.f32.mrf.mxu0
    %v166 = vadd.f32 %v133, %v165
    %167 = vmatmul.f32.gmra.mxu0 %v140
    %v168 = vpop.f32.mrf.mxu0
    %v169 = vadd.f32 %v133, %v168
    %170 = vmatmul.f32.gmra.mxu0 %v143
    %v171 = vpop.f32.mrf.mxu0
    %v172 = vadd.f32 %v133, %v171
    %173 = vmatmul.f32.gmra.mxu0 %v146
    %v174 = vpop.f32.mrf.mxu0
    %v175 = vadd.f32 %v133, %v174
    %176 = vdwg.mxu0
    %v178 = vsel %vm135, %v91, 0
    %v181 = vsel %vm135, %v92, 0
    %v184 = vsel %vm135, %v93, 0
    %v187 = vsel %vm135, %v94, 0
    %v190 = vsel %vm135, %v95, 0
    %v193 = vsel %vm135, %v96, 0
    %v196 = vsel %vm135, %v97, 0
    %v199 = vsel %vm135, %v98, 0
    %v202 = vsel %vm135, %v99, 0
    %v205 = vsel %vm135, %v100, 0
    %v208 = vsel %vm135, %v101, 0
    %v211 = vsel %vm135, %v102, 0
    %v214 = vsel %vm135, %v103, 0
    %v217 = vsel %vm135, %v104, 0
    %v220 = vsel %vm135, %v105, 0
    %v223 = vsel %vm135, %v106, 0
    %v226 = vsel %vm135, %v107, 0
    %v229 = vsel %vm135, %v108, 0
    %v232 = vsel %vm135, %v109, 0
    %v235 = vsel %vm135, %v110, 0
    %v238 = vsel %vm135, %v111, 0
    %v241 = vsel %vm135, %v112, 0
    %v244 = vsel %vm135, %v113, 0
    %v247 = vsel %vm135, %v114, 0
    %v250 = vsel %vm135, %v115, 0
    %v253 = vsel %vm135, %v116, 0
    %v256 = vsel %vm135, %v117, 0
    %v259 = vsel %vm135, %v118, 0
    %v262 = vsel %vm135, %v119, 0
    %v265 = vsel %vm135, %v120, 0
    %v268 = vsel %vm135, %v121, 0
    %v271 = vsel %vm135, %v122, 0
    %273 = vmatpush.msra.mxu0 0.0
    %274 = vmatpush.msra.mxu0 0.0
    %275 = vmatpush.msra.mxu0 0.0
    %276 = vmatpush.msra.mxu0 0.0
    %277 = vmatpush.msra.mxu0 0.0
    %278 = vmatpush.msra.mxu0 0.0
    %279 = vmatpush.msra.mxu0 0.0
    %280 = vmatpush.msra.mxu0 0.0
    %281 = vmatpush.msra.mxu0 0.0
    %282 = vmatpush.msra.mxu0 0.0
    %283 = vmatpush.msra.mxu0 0.0
    %284 = vmatpush.msra.mxu0 0.0
    %285 = vmatpush.msra.mxu0 %v130
    %286 = vmatpush.msra.mxu0 %v129
    %287 = vmatpush.msra.mxu0 %v128
    %288 = vmatpush.msra.mxu0 %v127
    %289 = vmatmul.f32.gmra.mxu0 %v178
    %v290 = vpop.f32.mrf.mxu0
    %v291 = vadd.f32 0.0, %v290
    %292 = vmatmul.f32.gmra.mxu0 %v181
    %v293 = vpop.f32.mrf.mxu0
    %v294 = vadd.f32 0.0, %v293
    %295 = vmatmul.f32.gmra.mxu0 %v184
    %v296 = vpop.f32.mrf.mxu0
    %v297 = vadd.f32 0.0, %v296
    %298 = vmatmul.f32.gmra.mxu0 %v187
    %v299 = vpop.f32.mrf.mxu0
    %v300 = vadd.f32 0.0, %v299
    %301 = vmatmul.f32.gmra.mxu0 %v190
    %v302 = vpop.f32.mrf.mxu0
    %v303 = vadd.f32 0.0, %v302
    %304 = vmatmul.f32.gmra.mxu0 %v193
    %v305 = vpop.f32.mrf.mxu0
    %v306 = vadd.f32 0.0, %v305
    %307 = vmatmul.f32.gmra.mxu0 %v196
    %v308 = vpop.f32.mrf.mxu0
    %v309 = vadd.f32 0.0, %v308
    %310 = vmatmul.f32.gmra.mxu0 %v199
    %v311 = vpop.f32.mrf.mxu0
    %v312 = vadd.f32 0.0, %v311
    %313 = vmatmul.f32.gmra.mxu0 %v202
    %v314 = vpop.f32.mrf.mxu0
    %v315 = vadd.f32 0.0, %v314
    %316 = vmatmul.f32.gmra.mxu0 %v205
    %v317 = vpop.f32.mrf.mxu0
    %v318 = vadd.f32 0.0, %v317
    %319 = vmatmul.f32.gmra.mxu0 %v208
    %v320 = vpop.f32.mrf.mxu0
    %v321 = vadd.f32 0.0, %v320
    %322 = vmatmul.f32.gmra.mxu0 %v211
    %v323 = vpop.f32.mrf.mxu0
    %v324 = vadd.f32 0.0, %v323
    %325 = vmatmul.f32.gmra.mxu0 %v214
    %v326 = vpop.f32.mrf.mxu0
    %v327 = vadd.f32 0.0, %v326
    %328 = vmatmul.f32.gmra.mxu0 %v217
    %v329 = vpop.f32.mrf.mxu0
    %v330 = vadd.f32 0.0, %v329
    %331 = vmatmul.f32.gmra.mxu0 %v220
    %v332 = vpop.f32.mrf.mxu0
    %v333 = vadd.f32 0.0, %v332
    %334 = vmatmul.f32.gmra.mxu0 %v223
    %v335 = vpop.f32.mrf.mxu0
    %v336 = vadd.f32 0.0, %v335
    %337 = vmatmul.f32.gmra.mxu0 %v226
    %v338 = vpop.f32.mrf.mxu0
    %v339 = vadd.f32 0.0, %v338
    %340 = vmatmul.f32.gmra.mxu0 %v229
    %v341 = vpop.f32.mrf.mxu0
    %v342 = vadd.f32 0.0, %v341
    %343 = vmatmul.f32.gmra.mxu0 %v232
    %v344 = vpop.f32.mrf.mxu0
    %v345 = vadd.f32 0.0, %v344
    %346 = vmatmul.f32.gmra.mxu0 %v235
    %v347 = vpop.f32.mrf.mxu0
    %v348 = vadd.f32 0.0, %v347
    %349 = vmatmul.f32.gmra.mxu0 %v238
    %v350 = vpop.f32.mrf.mxu0
    %v351 = vadd.f32 0.0, %v350
    %352 = vmatmul.f32.gmra.mxu0 %v241
    %v353 = vpop.f32.mrf.mxu0
    %v354 = vadd.f32 0.0, %v353
    %355 = vmatmul.f32.gmra.mxu0 %v244
    %v356 = vpop.f32.mrf.mxu0
    %v357 = vadd.f32 0.0, %v356
    %358 = vmatmul.f32.gmra.mxu0 %v247
    %v359 = vpop.f32.mrf.mxu0
    %v360 = vadd.f32 0.0, %v359
    %361 = vmatmul.f32.gmra.mxu0 %v250
    %v362 = vpop.f32.mrf.mxu0
    %v363 = vadd.f32 0.0, %v362
    %364 = vmatmul.f32.gmra.mxu0 %v253
    %v365 = vpop.f32.mrf.mxu0
    %v366 = vadd.f32 0.0, %v365
    %367 = vmatmul.f32.gmra.mxu0 %v256
    %v368 = vpop.f32.mrf.mxu0
    %v369 = vadd.f32 0.0, %v368
    %370 = vmatmul.f32.gmra.mxu0 %v259
    %v371 = vpop.f32.mrf.mxu0
    %v372 = vadd.f32 0.0, %v371
    %373 = vmatmul.f32.gmra.mxu0 %v262
    %v374 = vpop.f32.mrf.mxu0
    %v375 = vadd.f32 0.0, %v374
    %376 = vmatmul.f32.gmra.mxu0 %v265
    %v377 = vpop.f32.mrf.mxu0
    %v378 = vadd.f32 0.0, %v377
    %379 = vmatmul.f32.gmra.mxu0 %v268
    %v380 = vpop.f32.mrf.mxu0
    %v381 = vadd.f32 0.0, %v380
    %382 = vmatmul.f32.gmra.mxu0 %v271
    %v383 = vpop.f32.mrf.mxu0
    %v384 = vadd.f32 0.0, %v383
    %385 = vdwg.mxu0
    %v386 = vadd.f32 %v291, %v166
    %v387 = vadd.f32 %v294, %v169
    %v388 = vadd.f32 %v297, %v172
    %v389 = vadd.f32 %v300, %v175
    %v390 = vadd.f32 %v303, %v166
    %v391 = vadd.f32 %v306, %v169
    %v392 = vadd.f32 %v309, %v172
    %v393 = vadd.f32 %v312, %v175
    %v394 = vadd.f32 %v315, %v166
    %v395 = vadd.f32 %v318, %v169
    %v396 = vadd.f32 %v321, %v172
    %v397 = vadd.f32 %v324, %v175
    %v398 = vadd.f32 %v327, %v166
    %v399 = vadd.f32 %v330, %v169
    %v400 = vadd.f32 %v333, %v172
    %v401 = vadd.f32 %v336, %v175
    %v402 = vadd.f32 %v339, %v166
    %v403 = vadd.f32 %v342, %v169
    %v404 = vadd.f32 %v345, %v172
    %v405 = vadd.f32 %v348, %v175
    %v406 = vadd.f32 %v351, %v166
    %v407 = vadd.f32 %v354, %v169
    %v408 = vadd.f32 %v357, %v172
    %v409 = vadd.f32 %v360, %v175
    %v410 = vadd.f32 %v363, %v166
    %v411 = vadd.f32 %v366, %v169
    %v412 = vadd.f32 %v369, %v172
    %v413 = vadd.f32 %v372, %v175
    %v414 = vadd.f32 %v375, %v166
    %v415 = vadd.f32 %v378, %v169
    %v416 = vadd.f32 %v381, %v172
    %v417 = vadd.f32 %v384, %v175
    %v418 = vtanh.pop %v386
    %v419 = vtanh.pop %v387
    %v420 = vtanh.pop %v388
    %v421 = vtanh.pop %v389
    %v422 = vtanh.pop %v390
    %v423 = vtanh.pop %v391
    %v424 = vtanh.pop %v392
    %v425 = vtanh.pop %v393
    %v426 = vtanh.pop %v394
    %v427 = vtanh.pop %v395
    %v428 = vtanh.pop %v396
    %v429 = vtanh.pop %v397
    %v430 = vtanh.pop %v398
    %v431 = vtanh.pop %v399
    %v432 = vtanh.pop %v400
    %v433 = vtanh.pop %v401
    %v434 = vtanh.pop %v402
    %v435 = vtanh.pop %v403
    %v436 = vtanh.pop %v404
    %v437 = vtanh.pop %v405
    %v438 = vtanh.pop %v406
    %v439 = vtanh.pop %v407
    %v440 = vtanh.pop %v408
    %v441 = vtanh.pop %v409
    %v442 = vtanh.pop %v410
    %v443 = vtanh.pop %v411
    %v444 = vtanh.pop %v412
    %v445 = vtanh.pop %v413
    %v446 = vtanh.pop %v414
    %v447 = vtanh.pop %v415
    %v448 = vtanh.pop %v416
    %v449 = vtanh.pop %v417
    %v450 = vld [vmem:[%s5] sm:$0x1]
    %v452 = vperm.slane %v450, 0
    %v454 = vmul.f32 %v418, %v452
    %v455 = vmul.f32 %v419, %v452
    %v456 = vmul.f32 %v420, %v452
    %v457 = vmul.f32 %v421, %v452
    %v458 = vmul.f32 %v422, %v452
    %v459 = vmul.f32 %v423, %v452
    %v460 = vmul.f32 %v424, %v452
    %v461 = vmul.f32 %v425, %v452
    %v462 = vmul.f32 %v426, %v452
    %v463 = vmul.f32 %v427, %v452
    %v464 = vmul.f32 %v428, %v452
    %v465 = vmul.f32 %v429, %v452
    %v466 = vmul.f32 %v430, %v452
    %v467 = vmul.f32 %v431, %v452
    %v468 = vmul.f32 %v432, %v452
    %v469 = vmul.f32 %v433, %v452
    %v470 = vmul.f32 %v434, %v452
    %v471 = vmul.f32 %v435, %v452
    %v472 = vmul.f32 %v436, %v452
    %v473 = vmul.f32 %v437, %v452
    %v474 = vmul.f32 %v438, %v452
    %v475 = vmul.f32 %v439, %v452
    %v476 = vmul.f32 %v440, %v452
    %v477 = vmul.f32 %v441, %v452
    %v478 = vmul.f32 %v442, %v452
    %v479 = vmul.f32 %v443, %v452
    %v480 = vmul.f32 %v444, %v452
    %v481 = vmul.f32 %v445, %v452
    %v482 = vmul.f32 %v446, %v452
    %v483 = vmul.f32 %v447, %v452
    %v484 = vmul.f32 %v448, %v452
    %v485 = vmul.f32 %v449, %v452
    %v486 = vsel %vm135, %v454, 0.0
    %487 = vadd.xlane.f32.xlu0 %v486
    %v488 = vpop.xlane.xlu0 %487
    %v489 = vsel %vm135, %v455, 0.0
    %490 = vadd.xlane.f32.xlu0 %v489
    %v491 = vpop.xlane.xlu0 %490
    %v492 = vsel %vm135, %v456, 0.0
    %493 = vadd.xlane.f32.xlu0 %v492
    %v494 = vpop.xlane.xlu0 %493
    %v495 = vsel %vm135, %v457, 0.0
    %496 = vadd.xlane.f32.xlu0 %v495
    %v497 = vpop.xlane.xlu0 %496
    %v498 = vsel %vm135, %v458, 0.0
    %499 = vadd.xlane.f32.xlu0 %v498
    %v500 = vpop.xlane.xlu0 %499
    %v501 = vsel %vm135, %v459, 0.0
    %502 = vadd.xlane.f32.xlu0 %v501
    %v503 = vpop.xlane.xlu0 %502
    %v504 = vsel %vm135, %v460, 0.0
    %505 = vadd.xlane.f32.xlu0 %v504
    %v506 = vpop.xlane.xlu0 %505
    %v507 = vsel %vm135, %v461, 0.0
    %508 = vadd.xlane.f32.xlu0 %v507
    %v509 = vpop.xlane.xlu0 %508
    %v510 = vsel %vm135, %v462, 0.0
    %511 = vadd.xlane.f32.xlu0 %v510
    %v512 = vpop.xlane.xlu0 %511
    %v513 = vsel %vm135, %v463, 0.0
    %514 = vadd.xlane.f32.xlu0 %v513
    %v515 = vpop.xlane.xlu0 %514
    %v516 = vsel %vm135, %v464, 0.0
    %517 = vadd.xlane.f32.xlu0 %v516
    %v518 = vpop.xlane.xlu0 %517
    %v519 = vsel %vm135, %v465, 0.0
    %520 = vadd.xlane.f32.xlu0 %v519
    %v521 = vpop.xlane.xlu0 %520
    %v522 = vsel %vm135, %v466, 0.0
    %523 = vadd.xlane.f32.xlu0 %v522
    %v524 = vpop.xlane.xlu0 %523
    %v525 = vsel %vm135, %v467, 0.0
    %526 = vadd.xlane.f32.xlu0 %v525
    %v527 = vpop.xlane.xlu0 %526
    %v528 = vsel %vm135, %v468, 0.0
    %529 = vadd.xlane.f32.xlu0 %v528
    %v530 = vpop.xlane.xlu0 %529
    %v531 = vsel %vm135, %v469, 0.0
    %532 = vadd.xlane.f32.xlu0 %v531
    %v533 = vpop.xlane.xlu0 %532
    %v534 = vsel %vm135, %v470, 0.0
    %535 = vadd.xlane.f32.xlu0 %v534
    %v536 = vpop.xlane.xlu0 %535
    %v537 = vsel %vm135, %v471, 0.0
    %538 = vadd.xlane.f32.xlu0 %v537
    %v539 = vpop.xlane.xlu0 %538
    %v540 = vsel %vm135, %v472, 0.0
    %541 = vadd.xlane.f32.xlu0 %v540
    %v542 = vpop.xlane.xlu0 %541
    %v543 = vsel %vm135, %v473, 0.0
    %544 = vadd.xlane.f32.xlu0 %v543
    %v545 = vpop.xlane.xlu0 %544
    %v546 = vsel %vm135, %v474, 0.0
    %547 = vadd.xlane.f32.xlu0 %v546
    %v548 = vpop.xlane.xlu0 %547
    %v549 = vsel %vm135, %v475, 0.0
    %550 = vadd.xlane.f32.xlu0 %v549
    %v551 = vpop.xlane.xlu0 %550
    %v552 = vsel %vm135, %v476, 0.0
    %553 = vadd.xlane.f32.xlu0 %v552
    %v554 = vpop.xlane.xlu0 %553
    %v555 = vsel %vm135, %v477, 0.0
    %556 = vadd.xlane.f32.xlu0 %v555
    %v557 = vpop.xlane.xlu0 %556
    %v558 = vsel %vm135, %v478, 0.0
    %559 = vadd.xlane.f32.xlu0 %v558
    %v560 = vpop.xlane.xlu0 %559
    %v561 = vsel %vm135, %v479, 0.0
    %562 = vadd.xlane.f32.xlu0 %v561
    %v563 = vpop.xlane.xlu0 %562
    %v564 = vsel %vm135, %v480, 0.0
    %565 = vadd.xlane.f32.xlu0 %v564
    %v566 = vpop.xlane.xlu0 %565
    %v567 = vsel %vm135, %v481, 0.0
    %568 = vadd.xlane.f32.xlu0 %v567
    %v569 = vpop.xlane.xlu0 %568
    %v570 = vsel %vm135, %v482, 0.0
    %571 = vadd.xlane.f32.xlu0 %v570
    %v572 = vpop.xlane.xlu0 %571
    %v573 = vsel %vm135, %v483, 0.0
    %574 = vadd.xlane.f32.xlu0 %v573
    %v575 = vpop.xlane.xlu0 %574
    %v576 = vsel %vm135, %v484, 0.0
    %577 = vadd.xlane.f32.xlu0 %v576
    %v578 = vpop.xlane.xlu0 %577
    %v579 = vsel %vm135, %v485, 0.0
    %580 = vadd.xlane.f32.xlu0 %v579
    %v581 = vpop.xlane.xlu0 %580
    %v614 = vlaneseq
    %v615 = vand.u32 %v614, 127
    %v616 = vperm.slane %v488, %v615
    %v617 = vadd.s32 %v615, 4294967288
    %v618 = vperm.slane %v491, %v617
    %vm619 = vcmask 130112
    %v620 = vsel %vm619, %v618, %v616
    %v621 = vadd.s32 %v615, 4294967280
    %v622 = vperm.slane %v494, %v621
    %vm623 = vcmask 195712
    %v624 = vsel %vm623, %v622, %v620
    %v625 = vadd.s32 %v615, 4294967272
    %v626 = vperm.slane %v497, %v625
    %vm627 = vcmask 261312
    %v628 = vsel %vm627, %v626, %v624
    %v629 = vperm.slane %v500, %v615
    %v630 = vperm.slane %v503, %v617
    %v631 = vsel %vm619, %v630, %v629
    %v632 = vperm.slane %v506, %v621
    %v633 = vsel %vm623, %v632, %v631
    %v634 = vperm.slane %v509, %v625
    %v635 = vsel %vm627, %v634, %v633
    %v636 = vperm.slane %v512, %v615
    %v637 = vperm.slane %v515, %v617
    %v638 = vsel %vm619, %v637, %v636
    %v639 = vperm.slane %v518, %v621
    %v640 = vsel %vm623, %v639, %v638
    %v641 = vperm.slane %v521, %v625
    %v642 = vsel %vm627, %v641, %v640
    %v643 = vperm.slane %v524, %v615
    %v644 = vperm.slane %v527, %v617
    %v645 = vsel %vm619, %v644, %v643
    %v646 = vperm.slane %v530, %v621
    %v647 = vsel %vm623, %v646, %v645
    %v648 = vperm.slane %v533, %v625
    %v649 = vsel %vm627, %v648, %v647
    %v650 = vperm.slane %v536, %v615
    %v651 = vperm.slane %v539, %v617
    %v652 = vsel %vm619, %v651, %v650
    %v653 = vperm.slane %v542, %v621
    %v654 = vsel %vm623, %v653, %v652
    %v655 = vperm.slane %v545, %v625
    %v656 = vsel %vm627, %v655, %v654
    %v657 = vperm.slane %v548, %v615
    %v658 = vperm.slane %v551, %v617
    %v659 = vsel %vm619, %v658, %v657
    %v660 = vperm.slane %v554, %v621
    %v661 = vsel %vm623, %v660, %v659
    %v662 = vperm.slane %v557, %v625
    %v663 = vsel %vm627, %v662, %v661
    %v664 = vperm.slane %v560, %v615
    %v665 = vperm.slane %v563, %v617
    %v666 = vsel %vm619, %v665, %v664
    %v667 = vperm.slane %v566, %v621
    %v668 = vsel %vm623, %v667, %v666
    %v669 = vperm.slane %v569, %v625
    %v670 = vsel %vm627, %v669, %v668
    %v671 = vperm.slane %v572, %v615
    %v672 = vperm.slane %v575, %v617
    %v673 = vsel %vm619, %v672, %v671
    %v674 = vperm.slane %v578, %v621
    %v675 = vsel %vm623, %v674, %v673
    %v676 = vperm.slane %v581, %v625
    %v677 = vsel %vm627, %v676, %v675
    %vm678 = vcmask 1041409
    %v679 = vsel %vm678, %v635, %v628
    %vm680 = vcmask 1042434
    %v681 = vsel %vm680, %v642, %v679
    %vm682 = vcmask 1043459
    %v683 = vsel %vm682, %v649, %v681
    %vm684 = vcmask 1044484
    %v685 = vsel %vm684, %v656, %v683
    %vm686 = vcmask 1045509
    %v687 = vsel %vm686, %v663, %v685
    %vm688 = vcmask 1046534
    %v689 = vsel %vm688, %v670, %v687
    %vm690 = vcmask 1047559
    %v691 = vsel %vm690, %v677, %v689
    %693 = vxpose.xlu0.b32.start [1/16] %v691, 128
    %694 = vxpose.xlu0.b32.cont [2/16] 0.0, 128
    %695 = vxpose.xlu0.b32.cont [3/16] 0.0, 128
    %696 = vxpose.xlu0.b32.cont [4/16] 0.0, 128
    %697 = vxpose.xlu0.b32.cont [5/16] 0.0, 128
    %698 = vxpose.xlu0.b32.cont [6/16] 0.0, 128
    %699 = vxpose.xlu0.b32.cont [7/16] 0.0, 128
    %700 = vxpose.xlu0.b32.cont [8/16] 0.0, 128
    %701 = vxpose.xlu0.b32.cont [9/16] 0.0, 128
    %702 = vxpose.xlu0.b32.cont [10/16] 0.0, 128
    %703 = vxpose.xlu0.b32.cont [11/16] 0.0, 128
    %704 = vxpose.xlu0.b32.cont [12/16] 0.0, 128
    %705 = vxpose.xlu0.b32.cont [13/16] 0.0, 128
    %706 = vxpose.xlu0.b32.cont [14/16] 0.0, 128
    %707 = vxpose.xlu0.b32.cont [15/16] 0.0, 128
    %708 = vxpose.xlu0.b32.end [16/16] 0.0, 128
    %v709 = vpop.trf.xlu0
    %v710 = vpop.trf.xlu0
    %v711 = vpop.trf.xlu0
    %v712 = vpop.trf.xlu0
    %v713 = vpop.trf.xlu0
    %v714 = vpop.trf.xlu0
    %v715 = vpop.trf.xlu0
    %v716 = vpop.trf.xlu0
    %v717 = vpop.trf.xlu0
    %v718 = vpop.trf.xlu0
    %v719 = vpop.trf.xlu0
    %v720 = vpop.trf.xlu0
    %v721 = vpop.trf.xlu0
    %v722 = vpop.trf.xlu0
    %v723 = vpop.trf.xlu0
    %v724 = vpop.trf.xlu0
    %vm725 = vcmask 64512
    %v726 = vsel %vm725, %v709, -inf
    %727 = vmax.xlane.f32.xlu0 %v726
    %v728 = vpop.xlane.xlu0 %727
    %v729 = vsel %vm725, %v710, -inf
    %730 = vmax.xlane.f32.xlu0 %v729
    %v731 = vpop.xlane.xlu0 %730
    %v732 = vsel %vm725, %v711, -inf
    %733 = vmax.xlane.f32.xlu0 %v732
    %v734 = vpop.xlane.xlu0 %733
    %v735 = vsel %vm725, %v712, -inf
    %736 = vmax.xlane.f32.xlu0 %v735
    %v737 = vpop.xlane.xlu0 %736
    %v738 = vsub.f32 %v709, %v728
    %v739 = vsub.f32 %v710, %v731
    %v740 = vsub.f32 %v711, %v734
    %v741 = vsub.f32 %v712, %v737
    %v742 = vmul.f32 %v738, 1.442695
    %v743 = vpow.pop %v742
    %v744 = vmul.f32 %v739, 1.442695
    %v745 = vpow.pop %v744
    %v746 = vmul.f32 %v740, 1.442695
    %v747 = vpow.pop %v746
    %v748 = vmul.f32 %v741, 1.442695
    %v749 = vpow.pop %v748
    %v750 = vsel %vm725, %v743, 0.0
    %751 = vadd.xlane.f32.xlu0 %v750
    %v752 = vpop.xlane.xlu0 %751
    %v753 = vsel %vm725, %v745, 0.0
    %754 = vadd.xlane.f32.xlu0 %v753
    %v755 = vpop.xlane.xlu0 %754
    %v756 = vsel %vm725, %v747, 0.0
    %757 = vadd.xlane.f32.xlu0 %v756
    %v758 = vpop.xlane.xlu0 %757
    %v759 = vsel %vm725, %v749, 0.0
    %760 = vadd.xlane.f32.xlu0 %v759
    %v761 = vpop.xlane.xlu0 %760
    %v762 = vrcp.pop %v752
    %v763 = vrcp.pop %v755
    %v764 = vrcp.pop %v758
    %v765 = vrcp.pop %v761
    %v766 = vmul.f32 %v743, %v762
    %v767 = vmul.f32 %v745, %v763
    %v768 = vmul.f32 %v747, %v764
    %v769 = vmul.f32 %v749, %v765
    %v770 = vsel %vm725, %v766, 0.0
    %v771 = vsel %vm725, %v767, 0.0
    %v772 = vsel %vm725, %v768, 0.0
    %v773 = vsel %vm725, %v769, 0.0
    %774 = vst [vmem:[#allocation10] sm:$0xff] %v770
    %775 = vst [vmem:[#allocation10 + $0x8] sm:$0xff] %v771
    %776 = vst [vmem:[#allocation10 + $0x10] sm:$0xff] %v772
    %777 = vst [vmem:[#allocation10 + $0x18] sm:$0xff] %v773
    // Predicated region
    $region42: #{tpu_custom_call.1} parent=1 // pred_check
      _
    $region43: #{tpu_custom_call.1} parent=1 // pred_check_branch
      %779 = sbr.rel (0) target = $region45
    $region44: #{tpu_custom_call.1} parent=1 // pred_region
      %781 = vsyncadd [#allocation4], 0
      %s782 = sshll.u32 [#allocation10], 4
      %s783 = int_to_ptr.vmem [resolvable:$true] %s782
      %s784 = sshll.u32 %s6, 4
      %s785 = int_to_ptr.hbm [resolvable:$true] %s784
      %790 = dma.vmem_to_hbm [thread:$0]  %s783, 512, %s785, [#allocation4], 128, 128, 8
    $region45: #{tpu_custom_call.1} parent=1 // pred_fallthru
      _
    // Predicated region
    $region46: #{tpu_custom_call.1} parent=1 // pred_check
      _
    $region47: #{tpu_custom_call.1} parent=1 // pred_check_branch
      %792 = sbr.rel (0) target = $region49
    $region48: #{tpu_custom_call.1} parent=1 // pred_region
      %794 = dma.done [#allocation4], 512
    $region49: #{tpu_custom_call.1} parent=1 // pred_fallthru
      _
    %795 = vsyncpa [#allocation3], 1
    %796 = vsyncpa [#allocation6], 1
    %797 = vsyncpa [#allocation9], 1
    %798 = vsyncpa [#allocation4], 1

</llo_original>
